<compile_context>
chip_gen: v5e
topology: v5e:2x2
jax: 0.10.0
libtpu: 0.0.40
codegen_flags: <defaults>
</compile_context>

<pallas_src>
import functools

import jax
import jax.numpy as jnp
from jax.experimental import pallas as pl
from jax.experimental.pallas import tpu as pltpu


def _autorec_kernel(x_ref, w_enc_ref, b_enc_ref, w_dec_ref, b_dec_ref,
                    o_ref, h_acc_ref, *, k_tiles):
    """Phased body: t < k_tiles -> encoder reduction; t >= k_tiles -> decoder."""
    t = pl.program_id(1)

    # ---------------- Phase A: encoder K-reduction over num_users ----------
    @pl.when(t == 0)
    def _init():
        h_acc_ref[...] = jnp.zeros_like(h_acc_ref)

    @pl.when(t < k_tiles)
    def _encode():
        # bf16 x bf16 on the MXU, f32 accumulate in VMEM scratch.
        h_acc_ref[...] += jnp.dot(x_ref[...], w_enc_ref[...],
                                  preferred_element_type=jnp.float32)

    @pl.when(t == k_tiles - 1)
    def _finalize_hidden():
        # Bias + sigmoid in f32.  Dropout: identity (eval mode).
        h_acc_ref[...] = jax.nn.sigmoid(h_acc_ref[...] + b_enc_ref[...])

    # ---------------- Phase B: decoder N tiles over num_users --------------
    @pl.when(t >= k_tiles)
    def _decode():
        h = h_acc_ref[...].astype(w_dec_ref.dtype)   # bf16 into the MXU
        y = jnp.dot(h, w_dec_ref[...], preferred_element_type=jnp.float32)
        y = y + b_dec_ref[...]
        o_ref[...] = jnp.maximum(y, 0.0).astype(o_ref.dtype)


def _pick_dim_tile(dim):
    """Lane-dense tile over num_users: prefer 512/256/128 (must divide dim)."""
    for cand in (512, 256, 128):
        if dim >= cand and dim % cand == 0:
            return cand
    return dim  # small / non-divisible num_users: use the full dimension


def _pick_batch_tile(batch):
    if batch <= 128:
        return batch  # one grid step; splitting tiny batches only adds overhead
    # >= 2 parallel grid steps (v7x megacore) with MXU-filling row tiles.
    return 128 if batch <= 512 else 256


def autorec_item_based(x, w_enc, b_enc, w_dec, b_dec, *,
                       tile_b=None, tile_k=None, tile_n=None,
                       stream_dtype=jnp.bfloat16):
    """Fused AutoRec item-based forward pass.

    x:     (B, num_users)
    w_enc: (num_users, num_hidden)  -- nn.Linear weight pre-transposed (in, out)
    b_enc: (1, num_hidden)
    w_dec: (num_hidden, num_users)  -- nn.Linear weight pre-transposed (in, out)
    b_dec: (1, num_users)
    """
    B, U = x.shape
    H = w_enc.shape[1]
    assert w_enc.shape == (U, H) and w_dec.shape == (H, U)
    assert b_enc.shape == (1, H) and b_dec.shape == (1, U)

    tile_b = _pick_batch_tile(B) if tile_b is None else tile_b
    tile_k = _pick_dim_tile(U) if tile_k is None else tile_k
    tile_n = _pick_dim_tile(U) if tile_n is None else tile_n
    # (8,128) sublane/lane constraint; ragged batch tiles are fine (output is
    # masked on writeback; padded rows compute garbage that never escapes).
    assert tile_b == B or tile_b % 8 == 0, "tile_b must be B or a multiple of 8"
    # Ragged K tiles would feed unmasked garbage into the encoder reduction.
    assert tile_k == U or U % tile_k == 0, "tile_k must divide num_users"
    assert tile_n == U or U % tile_n == 0, "tile_n must divide num_users"

    b_tiles = pl.cdiv(B, tile_b)
    k_tiles = pl.cdiv(U, tile_k)
    n_tiles = pl.cdiv(U, tile_n)
    last_k = k_tiles - 1

    # bf16 streaming of the large operands; biases stay f32.
    x_lo = x.astype(stream_dtype)
    w_enc_lo = w_enc.astype(stream_dtype)
    w_dec_lo = w_dec.astype(stream_dtype)
    b_enc_f32 = b_enc.astype(jnp.float32)
    b_dec_f32 = b_dec.astype(jnp.float32)

    # Rough VMEM budget (double-buffered inputs/output + scratch).  Raise the
    # scoped limit only when the default (16/32 MiB) would be exceeded; cap
    # with headroom below v7x's 64 MiB physical VMEM.
    esize = jnp.dtype(stream_dtype).itemsize
    vmem_est = (2 * (tile_b * tile_k + tile_k * H + H * tile_n) * esize
                + 2 * (H + tile_n) * 4
                + 2 * tile_b * tile_n * 4
                + tile_b * H * 4)
    vmem_limit = None
    if vmem_est > 24 * 1024 * 1024:
        vmem_limit = min(int(vmem_est * 1.5), 60 * 1024 * 1024)

    kernel = functools.partial(_autorec_kernel, k_tiles=k_tiles)

    return pl.pallas_call(
        kernel,
        out_shape=jax.ShapeDtypeStruct((B, U), x.dtype),
        grid=(b_tiles, k_tiles + n_tiles),
        in_specs=[
            # Encoder-phase operands: clamp to the last K block during the
            # decoder phase so the resident block is reused (no extra DMA).
            pl.BlockSpec((tile_b, tile_k),
                         lambda i, t: (i, jnp.minimum(t, last_k))),
            pl.BlockSpec((tile_k, H),
                         lambda i, t: (jnp.minimum(t, last_k), 0)),
            pl.BlockSpec((1, H), lambda i, t: (0, 0)),
            # Decoder-phase operands: sit on N block 0 during the encoder
            # phase, then advance over num_users.
            pl.BlockSpec((H, tile_n),
                         lambda i, t: (0, jnp.maximum(t - k_tiles, 0))),
            pl.BlockSpec((1, tile_n),
                         lambda i, t: (0, jnp.maximum(t - k_tiles, 0))),
        ],
        out_specs=pl.BlockSpec((tile_b, tile_n),
                               lambda i, t: (i, jnp.maximum(t - k_tiles, 0))),
        scratch_shapes=[pltpu.VMEM((tile_b, H), jnp.float32)],
        compiler_params=pltpu.CompilerParams(
            dimension_semantics=("parallel", "arbitrary"),
            vmem_limit_bytes=vmem_limit),
    )(x_lo, w_enc_lo, b_enc_f32, w_dec_lo, b_dec_f32)


def _reference(x, w_enc, b_enc, w_dec, b_dec, stream_dtype=jnp.bfloat16):
    """Pure-JAX reference matching the kernel's numerics (bf16 in, f32 acc)."""
    h = jnp.dot(x.astype(stream_dtype), w_enc.astype(stream_dtype),
                preferred_element_type=jnp.float32) + b_enc
    h = jax.nn.sigmoid(h)
    y = jnp.dot(h.astype(stream_dtype), w_dec.astype(stream_dtype),
                preferred_element_type=jnp.float32) + b_dec
    return jnp.maximum(y, 0.0).astype(x.dtype)


if __name__ == "__main__":
    # Small shapes consistent with the module: batch=8, num_users=256, num_hidden=128.
    batch, num_users, num_hidden = 8, 256, 128

    key = jax.random.PRNGKey(0)
    kx, k1, k2, k3, k4 = jax.random.split(key, 5)

    # PyTorch nn.Linear-style uniform init bounds; weights stored pre-transposed
    # as (in_features, out_features).
    bound_enc = 1.0 / jnp.sqrt(float(num_users))
    bound_dec = 1.0 / jnp.sqrt(float(num_hidden))
    w_enc = jax.random.uniform(k1, (num_users, num_hidden), jnp.float32,
                               -bound_enc, bound_enc)
    b_enc = jax.random.uniform(k2, (1, num_hidden), jnp.float32,
                               -bound_enc, bound_enc)
    w_dec = jax.random.uniform(k3, (num_hidden, num_users), jnp.float32,
                               -bound_dec, bound_dec)
    b_dec = jax.random.uniform(k4, (1, num_users), jnp.float32,
                               -bound_dec, bound_dec)

    x = jax.random.normal(kx, (batch, num_users), jnp.float32)

    out = autorec_item_based(x, w_enc, b_enc, w_dec, b_dec)
    out = jax.block_until_ready(out)

    ref = _reference(x, w_enc, b_enc, w_dec, b_dec)
    assert out.shape == (batch, num_users)
    assert bool(jnp.allclose(out, ref, atol=1e-3, rtol=1e-3)), "mismatch vs reference"

    print("KERNEL_OK")
</pallas_src>

<mosaic_0001>
module attributes {stable_mosaic.version = 11 : i64} {
  func.func @_autorec_kernel(%arg0: i32, %arg1: i32, %arg2: memref<8x256xbf16, #tpu.memory_space<vmem>>, %arg3: memref<256x128xbf16, #tpu.memory_space<vmem>>, %arg4: memref<1x128xf32, #tpu.memory_space<vmem>>, %arg5: memref<128x256xbf16, #tpu.memory_space<vmem>>, %arg6: memref<1x256xf32, #tpu.memory_space<vmem>>, %arg7: memref<8x256xf32, #tpu.memory_space<vmem>>, %arg8: memref<8x128xf32, #tpu.memory_space<vmem>>) attributes {dimension_semantics = [#tpu.dimension_semantics<parallel>, #tpu.dimension_semantics<arbitrary>], iteration_bounds = array<i64: 1, 2>, scalar_prefetch = 0 : i64, scratch_operands = 1 : i64, tpu.core_type = #tpu.core_type<tc>, window_params = [{transform_indices = @transform_0, window_bounds = array<i64: 8, 256>}, {transform_indices = @transform_1, window_bounds = array<i64: 256, 128>}, {pipeline_mode = #tpu.pipeline_mode<synchronous>, transform_indices = @transform_2, window_bounds = array<i64: 1, 128>}, {transform_indices = @transform_3, window_bounds = array<i64: 128, 256>}, {transform_indices = @transform_4, window_bounds = array<i64: 1, 256>}, {transform_indices = @transform_5, window_bounds = array<i64: 8, 256>}]} {
    %c0_i32 = arith.constant 0 : i32
    %0 = arith.cmpi eq, %arg1, %c0_i32 : i32
    %1 = arith.extui %0 : i1 to i32
    %c0_i32_0 = arith.constant 0 : i32
    %2 = arith.cmpi ne, %1, %c0_i32_0 : i32
    scf.if %2 {
      %cst = arith.constant 0.000000e+00 : f32
      %12 = vector.broadcast %cst : f32 to vector<8x128xf32>
      %c0 = arith.constant 0 : index
      %c0_6 = arith.constant 0 : index
      %13 = vector.load %arg8[%c0, %c0_6] : memref<8x128xf32, #tpu.memory_space<vmem>>, vector<8x128xf32>
      tpu.vector_store %arg8[%c0, %c0_6], %12 {strides = array<i32>} : memref<8x128xf32, #tpu.memory_space<vmem>>, vector<8x128xf32>,
    } else {
    }
    %c1_i32 = arith.constant 1 : i32
    %3 = arith.cmpi slt, %arg1, %c1_i32 : i32
    %4 = arith.extui %3 : i1 to i32
    %c0_i32_1 = arith.constant 0 : i32
    %5 = arith.cmpi ne, %4, %c0_i32_1 : i32
    scf.if %5 {
      %c0 = arith.constant 0 : index
      %c0_6 = arith.constant 0 : index
      %12 = vector.load %arg8[%c0, %c0_6] : memref<8x128xf32, #tpu.memory_space<vmem>>, vector<8x128xf32>
      %c0_7 = arith.constant 0 : index
      %c0_8 = arith.constant 0 : index
      %13 = vector.load %arg2[%c0_7, %c0_8] : memref<8x256xbf16, #tpu.memory_space<vmem>>, vector<8x256xbf16>
      %c0_9 = arith.constant 0 : index
      %c0_10 = arith.constant 0 : index
      %14 = vector.load %arg3[%c0_9, %c0_10] : memref<256x128xbf16, #tpu.memory_space<vmem>>, vector<256x128xbf16>
      %cst = arith.constant dense<0.000000e+00> : vector<8x128xf32>
      %15 = tpu.matmul %13, %14, %cst {dimension_numbers = #tpu.dot_dimension_numbers<[1], [0], [0], [1], [0, 0, 1, 1], [], []>} : vector<8x256xbf16>, vector<256x128xbf16>, vector<8x128xf32> -> vector<8x128xf32>
      %16 = arith.addf %12, %15 : vector<8x128xf32>
      %c0_11 = arith.constant 0 : index
      %c0_12 = arith.constant 0 : index
      %17 = vector.load %arg8[%c0_11, %c0_12] : memref<8x128xf32, #tpu.memory_space<vmem>>, vector<8x128xf32>
      tpu.vector_store %arg8[%c0_11, %c0_12], %16 {strides = array<i32>} : memref<8x128xf32, #tpu.memory_space<vmem>>, vector<8x128xf32>,
    } else {
    }
    %c0_i32_2 = arith.constant 0 : i32
    %6 = arith.cmpi eq, %arg1, %c0_i32_2 : i32
    %7 = arith.extui %6 : i1 to i32
    %c0_i32_3 = arith.constant 0 : i32
    %8 = arith.cmpi ne, %7, %c0_i32_3 : i32
    scf.if %8 {
      %c0 = arith.constant 0 : index
      %c0_6 = arith.constant 0 : index
      %12 = vector.load %arg8[%c0, %c0_6] : memref<8x128xf32, #tpu.memory_space<vmem>>, vector<8x128xf32>
      %c0_7 = arith.constant 0 : index
      %c0_8 = arith.constant 0 : index
      %13 = vector.load %arg4[%c0_7, %c0_8] : memref<1x128xf32, #tpu.memory_space<vmem>>, vector<1x128xf32>
      %14 = vector.broadcast %13 : vector<1x128xf32> to vector<8x128xf32>
      %15 = arith.addf %12, %14 : vector<8x128xf32>
      %16 = arith.negf %15 : vector<8x128xf32>
      %17 = math.exp %16 : vector<8x128xf32>
      %cst = arith.constant 1.000000e+00 : f32
      %18 = vector.broadcast %cst : f32 to vector<8x128xf32>
      %19 = arith.addf %18, %17 : vector<8x128xf32>
      %20 = arith.divf %18, %19 : vector<8x128xf32>
      %c0_9 = arith.constant 0 : index
      %c0_10 = arith.constant 0 : index
      %21 = vector.load %arg8[%c0_9, %c0_10] : memref<8x128xf32, #tpu.memory_space<vmem>>, vector<8x128xf32>
      tpu.vector_store %arg8[%c0_9, %c0_10], %20 {strides = array<i32>} : memref<8x128xf32, #tpu.memory_space<vmem>>, vector<8x128xf32>,
    } else {
    }
    %c1_i32_4 = arith.constant 1 : i32
    %9 = arith.cmpi sge, %arg1, %c1_i32_4 : i32
    %10 = arith.extui %9 : i1 to i32
    %c0_i32_5 = arith.constant 0 : i32
    %11 = arith.cmpi ne, %10, %c0_i32_5 : i32
    scf.if %11 {
      %c0 = arith.constant 0 : index
      %c0_6 = arith.constant 0 : index
      %12 = vector.load %arg8[%c0, %c0_6] : memref<8x128xf32, #tpu.memory_space<vmem>>, vector<8x128xf32>
      %13 = arith.truncf %12 : vector<8x128xf32> to vector<8x128xbf16>
      %c0_7 = arith.constant 0 : index
      %c0_8 = arith.constant 0 : index
      %14 = vector.load %arg5[%c0_7, %c0_8] : memref<128x256xbf16, #tpu.memory_space<vmem>>, vector<128x256xbf16>
      %cst = arith.constant dense<0.000000e+00> : vector<8x256xf32>
      %15 = tpu.matmul %13, %14, %cst {dimension_numbers = #tpu.dot_dimension_numbers<[1], [0], [0], [1], [0, 0, 1, 1], [], []>} : vector<8x128xbf16>, vector<128x256xbf16>, vector<8x256xf32> -> vector<8x256xf32>
      %c0_9 = arith.constant 0 : index
      %c0_10 = arith.constant 0 : index
      %16 = vector.load %arg6[%c0_9, %c0_10] : memref<1x256xf32, #tpu.memory_space<vmem>>, vector<1x256xf32>
      %17 = vector.broadcast %16 : vector<1x256xf32> to vector<8x256xf32>
      %18 = arith.addf %15, %17 : vector<8x256xf32>
      %cst_11 = arith.constant 0.000000e+00 : f32
      %19 = vector.broadcast %cst_11 : f32 to vector<8x256xf32>
      %20 = arith.maximumf %18, %19 : vector<8x256xf32>
      %c0_12 = arith.constant 0 : index
      %c0_13 = arith.constant 0 : index
      %21 = vector.load %arg7[%c0_12, %c0_13] : memref<8x256xf32, #tpu.memory_space<vmem>>, vector<8x256xf32>
      tpu.vector_store %arg7[%c0_12, %c0_13], %20 {strides = array<i32>} : memref<8x256xf32, #tpu.memory_space<vmem>>, vector<8x256xf32>,
    } else {
    }
    return
  }
  func.func @transform_0(%arg0: i32, %arg1: i32) -> (i32, i32) {
    %c0_i32 = arith.constant 0 : i32
    %0 = arith.minsi %arg1, %c0_i32 : i32
    %c0_i32_0 = arith.constant 0 : i32
    return %arg0, %0 : i32, i32
  }
  func.func @transform_1(%arg0: i32, %arg1: i32) -> (i32, i32) {
    %c0_i32 = arith.constant 0 : i32
    %0 = arith.minsi %arg1, %c0_i32 : i32
    %c0_i32_0 = arith.constant 0 : i32
    %c0_i32_1 = arith.constant 0 : i32
    return %0, %c0_i32_0 : i32, i32
  }
  func.func @transform_2(%arg0: i32, %arg1: i32) -> (i32, i32) {
    %c0_i32 = arith.constant 0 : i32
    %c0_i32_0 = arith.constant 0 : i32
    %c0_i32_1 = arith.constant 0 : i32
    return %c0_i32, %c0_i32_0 : i32, i32
  }
  func.func @transform_3(%arg0: i32, %arg1: i32) -> (i32, i32) {
    %c1_i32 = arith.constant 1 : i32
    %0 = arith.subi %arg1, %c1_i32 : i32
    %c0_i32 = arith.constant 0 : i32
    %1 = arith.maxsi %0, %c0_i32 : i32
    %c0_i32_0 = arith.constant 0 : i32
    %c0_i32_1 = arith.constant 0 : i32
    return %c0_i32_0, %1 : i32, i32
  }
  func.func @transform_4(%arg0: i32, %arg1: i32) -> (i32, i32) {
    %c1_i32 = arith.constant 1 : i32
    %0 = arith.subi %arg1, %c1_i32 : i32
    %c0_i32 = arith.constant 0 : i32
    %1 = arith.maxsi %0, %c0_i32 : i32
    %c0_i32_0 = arith.constant 0 : i32
    %c0_i32_1 = arith.constant 0 : i32
    return %c0_i32_0, %1 : i32, i32
  }
  func.func @transform_5(%arg0: i32, %arg1: i32) -> (i32, i32) {
    %c1_i32 = arith.constant 1 : i32
    %0 = arith.subi %arg1, %c1_i32 : i32
    %c0_i32 = arith.constant 0 : i32
    %1 = arith.maxsi %0, %c0_i32 : i32
    %c0_i32_0 = arith.constant 0 : i32
    return %arg0, %1 : i32, i32
  }
}

</mosaic_0001>

<llo_original>
// kernel: tpu_custom_call.1
$region0: #{tpu_custom_call.1}
  #allocation0 [shape = 'u32[]', space=smem, size = 0x4, offset = 0x4, fixed_abs, tag = 'smem constant byte address 0x4 - core index']
  #allocation1 [shape = 'u32[72,128]{1,0:T(1,128)}', space=vmem, size = 0x9000, scoped, tag = 'internal scratch']
  #allocation2 [shape = 'f32[8,128]{1,0:T(8,128)}', space=vmem, size = 0x1000, scoped, tag = 'scratch operand']
  %s0 = inlined_call_operand.hbm [shape: bf16[8,256], index: 0, kind: input, shape index: {}]
  %s1 = inlined_call_operand.hbm [shape: bf16[256,128], index: 1, kind: input, shape index: {}]
  %s2 = inlined_call_operand.vmem [shape: f32[1,128], index: 2, kind: input, shape index: {}]
  %s3 = inlined_call_operand.hbm [shape: bf16[128,256], index: 3, kind: input, shape index: {}]
  %s4 = inlined_call_operand.vmem [shape: f32[1,256], index: 4, kind: input, shape index: {}]
  %s5 = inlined_call_operand.hbm [shape: f32[8,256], index: 5, kind: output, shape index: {}]
  %s6 = sld [smem:[#allocation0]]
  $region81: #{tpu_custom_call.1} parent=0
    _
  %s8 = ssub.s32 1, %s6
  %s9 = scalar_select 0, %s8, %s6
  $region1: #{tpu_custom_call.1} parent=0
    #allocation3 [shape = 'u8[8192]{0}', space=vmem, size = 0x2000, scoped, tag = 'input window, operand 0']
    #allocation4 [shape = 's32[2]{0}', space=sflag, size = 0x8, scoped, tag = 'scoped memory for tpu_custom_call.1']
    #allocation5 [shape = 's32[2]{0}', space=sflag, size = 0x8, scoped, tag = 'scoped memory for tpu_custom_call.1']
    #allocation6 [shape = 'u8[131072]{0}', space=vmem, size = 0x20000, scoped, tag = 'input window, operand 1']
    #allocation7 [shape = 's32[2]{0}', space=sflag, size = 0x8, scoped, tag = 'scoped memory for tpu_custom_call.1']
    #allocation8 [shape = 'u8[131072]{0}', space=vmem, size = 0x20000, scoped, tag = 'input window, operand 3']
    #allocation9 [shape = 'u8[16384]{0}', space=vmem, size = 0x4000, scoped, tag = 'output window, operand 0']
    %10 = vsyncpa [#allocation4], 0
    %s11 = scalar_lea.sflag [#allocation4], 1
    %12 = vsyncpa %s11, 0
    %13 = vsyncpa [#allocation7], 0
    %s14 = scalar_lea.sflag [#allocation7], 1
    %15 = vsyncpa %s14, 0
    %16 = vsyncpa [#allocation5], 0
    %s17 = scalar_lea.sflag [#allocation5], 1
    %18 = vsyncpa %s17, 0
    loop: start=0, step=1, limit=4
    $region2: #{tpu_custom_call.1} parent=1 // loop_pre_header
      _
    $region3: #{tpu_custom_call.1} parent=1 // loop_header
      %s20 = sphi 0, %s24
      %p21 = scmp.ge.s32.totalorder %s20, 4
      %s27 = sphi 0, %s39
      %s28 = sphi 0, %s35
      %s29 = sphi 0, %s27
      %s30 = sphi 0, %s28
      %s31 = sphi 0, %s29
      %s32 = sphi 0, %s30
      %s48 = sphi 0, %s50
      %s51 = sphi 0, %s48
      %s52 = sphi 0, %s51
      %s68 = sphi 0, %s52
      %s78 = sphi 0, %s80
      %s81 = sphi 0, %s78
      %s82 = sphi 0, %s81
      %s98 = sphi 0, %s82
      %s102 = sphi 0, %s102
      %s104 = sphi 0, %s102
      %s105 = sphi 0, %s104
      %s119 = sphi 0, %s105
      %s131 = sphi 0, %s133
      %s134 = sphi 0, %s131
      %s135 = sphi 0, %s134
      %s151 = sphi 0, %s135
      %s163 = sphi 0, %s165
      %s166 = sphi 0, %s163
      %s167 = sphi 0, %s166
      %s183 = sphi 0, %s167
      %s197 = sphi 0, %s199
      %s200 = sphi 0, %s197
      %s201 = sphi 0, %s200
      %s217 = sphi 0, %s201
    $region4: #{tpu_custom_call.1} parent=1 // loop_header_branch
      %23 = sbr.rel (%p21) target = $region8
    $region5: #{tpu_custom_call.1} parent=1 // loop_body
      %s25 = ssub.s32 %s20, 1
      %s26 = ssub.s32 %s20, 2
      %s33 = sadd.s32 1, %s28
      %p34 = scmp.ge.s32.totalorder %s33, 2
      %s35 = scalar_select %p34, 0, %s33
      %s36 = sadd.s32 1, %s27
      %s37 = scalar_select %p34, %s36, %s27
      %p38 = scmp.ge.s32.totalorder %s37, 1
      %s39 = scalar_select %p38, 0, %s37
      %p40 = scmp.lt.s32.totalorder %s28, 0
      %s41 = scalar_select %p40, %s28, 0
      %p42 = scmp.lt.s32.totalorder %s35, 0
      %s43 = scalar_select %p42, %s35, 0
      %s44 = ssub.s32 %s27, %s39
      %s45 = ssub.s32 %s41, %s43
      %s46 = sor.u32 %s44, %s45
      %p47 = scmp.eq.s32.totalorder %s46, 0
      %s49 = sadd.s32 %s48, 1
      %s50 = scalar_select %p47, %s48, %s49
      %p53 = pneg %p47
      %p54 = scmp.eq.s32.totalorder %s20, 1
      %p55 = por %p53, %p54
      %p56 = scmp.ne.s32.totalorder %s48, %s51
      %p57 = scmp.eq.s32.totalorder %s20, 0
      %p58 = por %p56, %p57
      %p59 = scmp.ne.s32.totalorder %s48, %s51
      %p60 = scmp.eq.s32.totalorder %s25, 1
      %p61 = por %p59, %p60
      %p62 = scmp.ne.s32.totalorder %s51, %s52
      %p63 = scmp.eq.s32.totalorder %s25, 0
      %p64 = por %p62, %p63
      %p65 = scmp.ne.s32.totalorder %s51, %s52
      %p66 = scmp.eq.s32.totalorder %s26, 1
      %p67 = por %p65, %p66
      %p69 = scmp.ne.s32.totalorder %s52, %s68
      %p70 = scmp.eq.s32.totalorder %s26, 0
      %p71 = por %p69, %p70
      %p72 = scmp.lt.s32.totalorder %s28, 0
      %s73 = scalar_select %p72, %s28, 0
      %p74 = scmp.lt.s32.totalorder %s35, 0
      %s75 = scalar_select %p74, %s35, 0
      %s76 = ssub.s32 %s73, %s75
      %p77 = scmp.eq.s32.totalorder %s76, 0
      %s79 = sadd.s32 %s78, 1
      %s80 = scalar_select %p77, %s78, %s79
      %p83 = pneg %p77
      %p84 = scmp.eq.s32.totalorder %s20, 1
      %p85 = por %p83, %p84
      %p86 = scmp.ne.s32.totalorder %s78, %s81
      %p87 = scmp.eq.s32.totalorder %s20, 0
      %p88 = por %p86, %p87
      %p89 = scmp.ne.s32.totalorder %s78, %s81
      %p90 = scmp.eq.s32.totalorder %s25, 1
      %p91 = por %p89, %p90
      %p92 = scmp.ne.s32.totalorder %s81, %s82
      %p93 = scmp.eq.s32.totalorder %s25, 0
      %p94 = por %p92, %p93
      %p95 = scmp.ne.s32.totalorder %s81, %s82
      %p96 = scmp.eq.s32.totalorder %s26, 1
      %p97 = por %p95, %p96
      %p99 = scmp.ne.s32.totalorder %s82, %s98
      %p100 = scmp.eq.s32.totalorder %s26, 0
      %p101 = por %p99, %p100
      %s103 = sadd.s32 %s102, 1
      %p106 = scmp.eq.s32.totalorder %s20, 1
      %p107 = scmp.ne.s32.totalorder %s102, %s104
      %p108 = scmp.eq.s32.totalorder %s20, 0
      %p109 = por %p107, %p108
      %p110 = scmp.ne.s32.totalorder %s102, %s104
      %p111 = scmp.eq.s32.totalorder %s25, 1
      %p112 = por %p110, %p111
      %p113 = scmp.ne.s32.totalorder %s104, %s105
      %p114 = scmp.eq.s32.totalorder %s25, 0
      %p115 = por %p113, %p114
      %p116 = scmp.ne.s32.totalorder %s104, %s105
      %p117 = scmp.eq.s32.totalorder %s26, 1
      %p118 = por %p116, %p117
      %p120 = scmp.ne.s32.totalorder %s105, %s119
      %p121 = scmp.eq.s32.totalorder %s26, 0
      %p122 = por %p120, %p121
      %s123 = ssub.s32 %s28, 1
      %p124 = scmp.gt.s32.totalorder %s123, 0
      %s125 = scalar_select %p124, %s123, 0
      %s126 = ssub.s32 %s35, 1
      %p127 = scmp.gt.s32.totalorder %s126, 0
      %s128 = scalar_select %p127, %s126, 0
      %s129 = ssub.s32 %s125, %s128
      %p130 = scmp.eq.s32.totalorder %s129, 0
      %s132 = sadd.s32 %s131, 1
      %s133 = scalar_select %p130, %s131, %s132
      %p136 = pneg %p130
      %p137 = scmp.eq.s32.totalorder %s20, 1
      %p138 = por %p136, %p137
      %p139 = scmp.ne.s32.totalorder %s131, %s134
      %p140 = scmp.eq.s32.totalorder %s20, 0
      %p141 = por %p139, %p140
      %p142 = scmp.ne.s32.totalorder %s131, %s134
      %p143 = scmp.eq.s32.totalorder %s25, 1
      %p144 = por %p142, %p143
      %p145 = scmp.ne.s32.totalorder %s134, %s135
      %p146 = scmp.eq.s32.totalorder %s25, 0
      %p147 = por %p145, %p146
      %p148 = scmp.ne.s32.totalorder %s134, %s135
      %p149 = scmp.eq.s32.totalorder %s26, 1
      %p150 = por %p148, %p149
      %p152 = scmp.ne.s32.totalorder %s135, %s151
      %p153 = scmp.eq.s32.totalorder %s26, 0
      %p154 = por %p152, %p153
      %s155 = ssub.s32 %s28, 1
      %p156 = scmp.gt.s32.totalorder %s155, 0
      %s157 = scalar_select %p156, %s155, 0
      %s158 = ssub.s32 %s35, 1
      %p159 = scmp.gt.s32.totalorder %s158, 0
      %s160 = scalar_select %p159, %s158, 0
      %s161 = ssub.s32 %s157, %s160
      %p162 = scmp.eq.s32.totalorder %s161, 0
      %s164 = sadd.s32 %s163, 1
      %s165 = scalar_select %p162, %s163, %s164
      %p168 = pneg %p162
      %p169 = scmp.eq.s32.totalorder %s20, 1
      %p170 = por %p168, %p169
      %p171 = scmp.ne.s32.totalorder %s163, %s166
      %p172 = scmp.eq.s32.totalorder %s20, 0
      %p173 = por %p171, %p172
      %p174 = scmp.ne.s32.totalorder %s163, %s166
      %p175 = scmp.eq.s32.totalorder %s25, 1
      %p176 = por %p174, %p175
      %p177 = scmp.ne.s32.totalorder %s166, %s167
      %p178 = scmp.eq.s32.totalorder %s25, 0
      %p179 = por %p177, %p178
      %p180 = scmp.ne.s32.totalorder %s166, %s167
      %p181 = scmp.eq.s32.totalorder %s26, 1
      %p182 = por %p180, %p181
      %p184 = scmp.ne.s32.totalorder %s167, %s183
      %p185 = scmp.eq.s32.totalorder %s26, 0
      %p186 = por %p184, %p185
      %s187 = ssub.s32 %s28, 1
      %p188 = scmp.gt.s32.totalorder %s187, 0
      %s189 = scalar_select %p188, %s187, 0
      %s190 = ssub.s32 %s35, 1
      %p191 = scmp.gt.s32.totalorder %s190, 0
      %s192 = scalar_select %p191, %s190, 0
      %s193 = ssub.s32 %s27, %s39
      %s194 = ssub.s32 %s189, %s192
      %s195 = sor.u32 %s193, %s194
      %p196 = scmp.eq.s32.totalorder %s195, 0
      %s198 = sadd.s32 %s197, 1
      %s199 = scalar_select %p196, %s197, %s198
      %p202 = pneg %p196
      %p203 = scmp.eq.s32.totalorder %s20, 1
      %p204 = por %p202, %p203
      %p205 = scmp.ne.s32.totalorder %s197, %s200
      %p206 = scmp.eq.s32.totalorder %s20, 0
      %p207 = por %p205, %p206
      %p208 = scmp.ne.s32.totalorder %s197, %s200
      %p209 = scmp.eq.s32.totalorder %s25, 1
      %p210 = por %p208, %p209
      %p211 = scmp.ne.s32.totalorder %s200, %s201
      %p212 = scmp.eq.s32.totalorder %s25, 0
      %p213 = por %p211, %p212
      %p214 = scmp.ne.s32.totalorder %s200, %s201
      %p215 = scmp.eq.s32.totalorder %s26, 1
      %p216 = por %p214, %p215
      %p218 = scmp.ne.s32.totalorder %s201, %s217
      %p219 = scmp.eq.s32.totalorder %s26, 0
      %p220 = por %p218, %p219
      %p221 = scmp.le.s32.totalorder 1, %s20
      %p222 = scmp.lt.s32.totalorder %s20, 3
      %p223 = pnand %p221, %p222
      %p224 = pneg %p223
      // Predicated region
      $region9: #{tpu_custom_call.1} parent=5 // pred_check
        _
      $region10: #{tpu_custom_call.1} parent=5 // pred_check_branch
        %226 = sbr.rel (%p223) target = $region12
      $region11: #{tpu_custom_call.1} parent=5 // pred_region
        %s227 = ssub.s32 %s20, 1
        // Predicated region
        $region13: #{tpu_custom_call.1} parent=11 // pred_check
          %p228 = pneg %p115
        $region14: #{tpu_custom_call.1} parent=11 // pred_check_branch
          %230 = sbr.rel (%p228) target = $region16
        $region15: #{tpu_custom_call.1} parent=11 // pred_region
          _
        $region16: #{tpu_custom_call.1} parent=11 // pred_fallthru
          _
      $region12: #{tpu_custom_call.1} parent=5 // pred_fallthru
        _
      %p231 = scmp.lt.s32.totalorder %s20, 2
      // Predicated region
      $region17: #{tpu_custom_call.1} parent=5 // pred_check
        %p232 = pneg %p231
      $region18: #{tpu_custom_call.1} parent=5 // pred_check_branch
        %234 = sbr.rel (%p232) target = $region20
      $region19: #{tpu_custom_call.1} parent=5 // pred_region
        // Predicated region
        $region21: #{tpu_custom_call.1} parent=19 // pred_check
          %p235 = pneg %p58
        $region22: #{tpu_custom_call.1} parent=19 // pred_check_branch
          %237 = sbr.rel (%p235) target = $region24
        $region23: #{tpu_custom_call.1} parent=19 // pred_region
          %s238 = sand.u32 %s48, 1
          %s239 = scalar_lea.sflag [#allocation4], %s238
          %s240 = sand.u32 %s48, 1
          %s241 = smul.addr %s240, 8
          %s242 = scalar_lea.vmem [#allocation3], %s241
          %p243 = scmp.lt.s32.totalorder %s28, 0
          %s244 = scalar_select %p243, %s28, 0
          %s245 = smul.u32 2, %s244
          %247 = vsyncadd %s239, 0
          %s248 = smul.addr %s27, 2
          %s249 = sadd.s32 %s245, %s248
          %s250 = smul.addr %s249, 4
          %s251 = scalar_lea.hbm %s0, %s250
          %s253 = sshll.u32 %s251, 4
          %s254 = int_to_ptr.hbm [resolvable:$true] %s253
          %s255 = sshll.u32 %s242, 4
          %s256 = int_to_ptr.vmem [resolvable:$true] %s255
          %258 = dma.hbm_to_vmem [thread:$0]  %s254, 128, %s256, %s239
        $region24: #{tpu_custom_call.1} parent=19 // pred_fallthru
          _
        // Predicated region
        $region25: #{tpu_custom_call.1} parent=19 // pred_check
          %p259 = pneg %p88
        $region26: #{tpu_custom_call.1} parent=19 // pred_check_branch
          %261 = sbr.rel (%p259) target = $region28
        $region27: #{tpu_custom_call.1} parent=19 // pred_region
          %s262 = sand.u32 %s20, 1
          %s263 = scalar_lea.sflag [#allocation7], %s262
          %s264 = sand.u32 %s78, 1
          %s265 = smul.addr %s264, 128
          %s266 = scalar_lea.vmem [#allocation6], %s265
          %p267 = scmp.lt.s32.totalorder %s28, 0
          %s268 = scalar_select %p267, %s28, 0
          %s269 = smul.u32 32, %s268
          %271 = vsyncadd %s263, 0
          %s272 = smul.addr %s269, 4
          %s273 = scalar_lea.hbm %s1, %s272
          %s274 = sshll.u32 %s273, 4
          %s275 = int_to_ptr.hbm [resolvable:$true] %s274
          %s276 = sshll.u32 %s266, 4
          %s277 = int_to_ptr.vmem [resolvable:$true] %s276
          %282 = dma.hbm_to_vmem [thread:$0]  %s275, 2048, %s277, %s263, 64, 64, 4
        $region28: #{tpu_custom_call.1} parent=19 // pred_fallthru
          _
        // Predicated region
        $region29: #{tpu_custom_call.1} parent=19 // pred_check
          %p283 = pneg %p141
        $region30: #{tpu_custom_call.1} parent=19 // pred_check_branch
          %285 = sbr.rel (%p283) target = $region32
        $region31: #{tpu_custom_call.1} parent=19 // pred_region
          %s286 = sand.u32 %s20, 1
          %s287 = scalar_lea.sflag [#allocation7], %s286
          %s288 = sand.u32 %s131, 1
          %s289 = smul.addr %s288, 128
          %s290 = scalar_lea.vmem [#allocation8], %s289
          %s291 = ssub.s32 %s28, 1
          %p292 = scmp.gt.s32.totalorder %s291, 0
          %s293 = scalar_select %p292, %s291, 0
          %s294 = smul.u32 2, %s293
          %296 = vsyncadd %s287, 0
          %s297 = smul.addr %s294, 4
          %s298 = scalar_lea.hbm %s3, %s297
          %s299 = sshll.u32 %s298, 4
          %s300 = int_to_ptr.hbm [resolvable:$true] %s299
          %s301 = sshll.u32 %s290, 4
          %s302 = int_to_ptr.vmem [resolvable:$true] %s301
          %307 = dma.hbm_to_vmem [thread:$0]  %s300, 2048, %s302, %s287, 128, 128, 8
        $region32: #{tpu_custom_call.1} parent=19 // pred_fallthru
          _
        // Predicated region
        $region33: #{tpu_custom_call.1} parent=19 // pred_check
          %p308 = pneg %p173
        $region34: #{tpu_custom_call.1} parent=19 // pred_check_branch
          %310 = sbr.rel (%p308) target = $region36
        $region35: #{tpu_custom_call.1} parent=19 // pred_region
          %s311 = ssub.s32 %s28, 1
          %p312 = scmp.gt.s32.totalorder %s311, 0
          %s313 = scalar_select %p312, %s311, 0
          %s314 = smul.u32 2, %s313
          %p315 = scmp.lt.s32.totalorder %s314, 1
          %s316 = scalar_select %p315, %s314, 1
          %s317 = scalar_lea.vmem %s4, %s316
          %s318 = ssub.s32 %s28, 1
          %p319 = scmp.gt.s32.totalorder %s318, 0
          %s320 = scalar_select %p319, %s318, 0
          %s321 = smul.u32 2, %s320
        $region36: #{tpu_custom_call.1} parent=19 // pred_fallthru
          _
      $region20: #{tpu_custom_call.1} parent=5 // pred_fallthru
        _
      %p322 = scmp.le.s32.totalorder 1, %s20
      %p323 = scmp.lt.s32.totalorder %s20, 3
      %p324 = pnand %p322, %p323
      %p325 = pneg %p324
      // Predicated region
      $region37: #{tpu_custom_call.1} parent=5 // pred_check
        _
      $region38: #{tpu_custom_call.1} parent=5 // pred_check_branch
        %327 = sbr.rel (%p324) target = $region40
      $region39: #{tpu_custom_call.1} parent=5 // pred_region
        %s328 = ssub.s32 %s20, 1
        %s329 = sand.u32 %s51, 1
        %s330 = scalar_lea.sflag [#allocation4], %s329
        %s331 = sand.u32 %s51, 1
        %s332 = smul.addr %s331, 8
        %s333 = scalar_lea.vmem [#allocation3], %s332
        // Predicated region
        $region41: #{tpu_custom_call.1} parent=39 // pred_check
          %p334 = pneg %p64
        $region42: #{tpu_custom_call.1} parent=39 // pred_check_branch
          %336 = sbr.rel (%p334) target = $region44
        $region43: #{tpu_custom_call.1} parent=39 // pred_region
          %338 = dma.done %s330, 128
        $region44: #{tpu_custom_call.1} parent=39 // pred_fallthru
          _
        %s339 = sand.u32 %s25, 1
        %s340 = scalar_lea.sflag [#allocation7], %s339
        %s341 = sand.u32 %s81, 1
        %s342 = smul.addr %s341, 128
        %s343 = scalar_lea.vmem [#allocation6], %s342
        // Predicated region
        $region45: #{tpu_custom_call.1} parent=39 // pred_check
          %p344 = pneg %p94
        $region46: #{tpu_custom_call.1} parent=39 // pred_check_branch
          %346 = sbr.rel (%p344) target = $region48
        $region47: #{tpu_custom_call.1} parent=39 // pred_region
          %348 = dma.done %s340, 2048
        $region48: #{tpu_custom_call.1} parent=39 // pred_fallthru
          _
        %s349 = sand.u32 %s25, 1
        %s350 = scalar_lea.sflag [#allocation7], %s349
        %s351 = sand.u32 %s134, 1
        %s352 = smul.addr %s351, 128
        %s353 = scalar_lea.vmem [#allocation8], %s352
        // Predicated region
        $region49: #{tpu_custom_call.1} parent=39 // pred_check
          %p354 = pneg %p147
        $region50: #{tpu_custom_call.1} parent=39 // pred_check_branch
          %356 = sbr.rel (%p354) target = $region52
        $region51: #{tpu_custom_call.1} parent=39 // pred_region
          %358 = dma.done %s350, 2048
        $region52: #{tpu_custom_call.1} parent=39 // pred_fallthru
          _
        %s359 = sand.u32 %s51, 1
        %s360 = scalar_lea.sflag [#allocation4], %s359
        %s361 = sand.u32 %s51, 1
        %s362 = smul.addr %s361, 8
        %s363 = scalar_lea.vmem [#allocation3], %s362
        %p364 = pneg %p64
        %p365 = pneg %p61
        %s366 = sand.u32 %s25, 1
        %s367 = scalar_lea.sflag [#allocation7], %s366
        %s368 = sand.u32 %s81, 1
        %s369 = smul.addr %s368, 128
        %s370 = scalar_lea.vmem [#allocation6], %s369
        %p371 = pneg %p94
        %p372 = pneg %p91
        %p373 = pneg %p115
        %p374 = pneg %p112
        %s375 = sand.u32 %s25, 1
        %s376 = scalar_lea.sflag [#allocation7], %s375
        %s377 = sand.u32 %s134, 1
        %s378 = smul.addr %s377, 128
        %s379 = scalar_lea.vmem [#allocation8], %s378
        %p380 = pneg %p147
        %p381 = pneg %p144
        %s382 = ssub.s32 %s30, 1
        %p383 = scmp.gt.s32.totalorder %s382, 0
        %s384 = scalar_select %p383, %s382, 0
        %s385 = smul.u32 2, %s384
        %p386 = scmp.lt.s32.totalorder %s385, 1
        %s387 = scalar_select %p386, %s385, 1
        %s388 = scalar_lea.vmem %s4, %s387
        %p389 = pneg %p179
        %p390 = pneg %p176
        %p391 = pneg %p213
        %p392 = pneg %p210
        %s393 = sand.u32 %s200, 1
        %s394 = scalar_lea.sflag [#allocation5], %s393
        %s395 = sand.u32 %s200, 1
        %s396 = smul.addr %s395, 16
        %s397 = scalar_lea.vmem [#allocation9], %s396
        %p398 = scmp.lt.s32.totalorder %s30, 0
        %s399 = scalar_select %p398, %s30, 0
        %s400 = smul.u32 2, %s399
        %p401 = scmp.lt.s32.totalorder %s30, 0
        %s402 = scalar_select %p401, %s30, 0
        %s403 = smul.u32 32, %s402
        %s404 = ssub.s32 %s30, 1
        %p405 = scmp.gt.s32.totalorder %s404, 0
        %s406 = scalar_select %p405, %s404, 0
        %s407 = smul.u32 2, %s406
        %s408 = ssub.s32 %s30, 1
        %p409 = scmp.gt.s32.totalorder %s408, 0
        %s410 = scalar_select %p409, %s408, 0
        %s411 = smul.u32 2, %s410
        %p412 = scmp.lt.s32.totalorder %s411, 1
        %s413 = scalar_select %p412, %s411, 1
        %s414 = scalar_lea.vmem %s4, %s413
        %s415 = ssub.s32 %s30, 1
        %p416 = scmp.gt.s32.totalorder %s415, 0
        %s417 = scalar_select %p416, %s415, 0
        %s418 = smul.u32 2, %s417
        %s419 = ssub.s32 %s30, 1
        %p420 = scmp.gt.s32.totalorder %s419, 0
        %s421 = scalar_select %p420, %s419, 0
        %s422 = smul.u32 2, %s421
        %p423 = scmp.eq.s32.totalorder %s30, 0
        // Predicated region
        $region53: #{tpu_custom_call.1} parent=39 // pred_check
          %p424 = pneg %p423
        $region54: #{tpu_custom_call.1} parent=39 // pred_check_branch
          %426 = sbr.rel (%p424) target = $region56
        $region55: #{tpu_custom_call.1} parent=39 // pred_region
          %427 = vst [vmem:[#allocation2] sm:$0xff] 0.0
        $region56: #{tpu_custom_call.1} parent=39 // pred_fallthru
          _
        %p428 = scmp.lt.s32.totalorder %s30, 1
        // Predicated region
        $region57: #{tpu_custom_call.1} parent=39 // pred_check
          %p429 = pneg %p428
        $region58: #{tpu_custom_call.1} parent=39 // pred_check_branch
          %431 = sbr.rel (%p429) target = $region60
        $region59: #{tpu_custom_call.1} parent=39 // pred_region
          %v432 = vld [vmem:[#allocation2] sm:$0xff]
          %v433 = vld [vmem:[%s333] sm:$0xff]
          %v434 = vld [vmem:[%s343] sm:$0xf]
          %v435 = vld [vmem:[%s343 + $0x4] sm:$0xf]
          %v436 = vld [vmem:[%s343 + $0x8] sm:$0xf]
          %v437 = vld [vmem:[%s343 + $0xc] sm:$0xf]
          %v438 = vld [vmem:[%s343 + $0x10] sm:$0xf]
          %v439 = vld [vmem:[%s343 + $0x14] sm:$0xf]
          %v440 = vld [vmem:[%s343 + $0x18] sm:$0xf]
          %v441 = vld [vmem:[%s343 + $0x1c] sm:$0xf]
          %v442 = vld [vmem:[%s343 + $0x20] sm:$0xf]
          %v443 = vld [vmem:[%s343 + $0x24] sm:$0xf]
          %v444 = vld [vmem:[%s343 + $0x28] sm:$0xf]
          %v445 = vld [vmem:[%s343 + $0x2c] sm:$0xf]
          %v446 = vld [vmem:[%s343 + $0x30] sm:$0xf]
          %v447 = vld [vmem:[%s343 + $0x34] sm:$0xf]
          %v448 = vld [vmem:[%s343 + $0x38] sm:$0xf]
          %v449 = vld [vmem:[%s343 + $0x3c] sm:$0xf]
          %v450 = vld [vmem:[%s343 + $0x40] sm:$0xf]
          %v451 = vld [vmem:[%s343 + $0x44] sm:$0xf]
          %v452 = vld [vmem:[%s343 + $0x48] sm:$0xf]
          %v453 = vld [vmem:[%s343 + $0x4c] sm:$0xf]
          %v454 = vld [vmem:[%s343 + $0x50] sm:$0xf]
          %v455 = vld [vmem:[%s343 + $0x54] sm:$0xf]
          %v456 = vld [vmem:[%s343 + $0x58] sm:$0xf]
          %v457 = vld [vmem:[%s343 + $0x5c] sm:$0xf]
          %v458 = vld [vmem:[%s343 + $0x60] sm:$0xf]
          %v459 = vld [vmem:[%s343 + $0x64] sm:$0xf]
          %v460 = vld [vmem:[%s343 + $0x68] sm:$0xf]
          %v461 = vld [vmem:[%s343 + $0x6c] sm:$0xf]
          %v462 = vld [vmem:[%s343 + $0x70] sm:$0xf]
          %v463 = vld [vmem:[%s343 + $0x74] sm:$0xf]
          %v464 = vld [vmem:[%s343 + $0x78] sm:$0xf]
          %v465 = vld [vmem:[%s343 + $0x7c] sm:$0xf]
          %v467 = vunpack.c.l.b16 %v433
          %v468 = vunpack.c.h.b16 %v433
          %v469 = vpack.c.b16 %v467, %v467
          %v470 = vpack.c.b16 %v468, %v468
          %v505 = vunpack.c.l.b16 %v434
          %v506 = vunpack.c.l.b16 %v435
          %v507 = vunpack.c.l.b16 %v436
          %v508 = vunpack.c.l.b16 %v437
          %v509 = vunpack.c.l.b16 %v438
          %v510 = vunpack.c.l.b16 %v439
          %v511 = vunpack.c.l.b16 %v440
          %v512 = vunpack.c.l.b16 %v441
          %v513 = vunpack.c.l.b16 %v442
          %v514 = vunpack.c.l.b16 %v443
          %v515 = vunpack.c.l.b16 %v444
          %v516 = vunpack.c.l.b16 %v445
          %v517 = vunpack.c.l.b16 %v446
          %v518 = vunpack.c.l.b16 %v447
          %v519 = vunpack.c.l.b16 %v448
          %v520 = vunpack.c.l.b16 %v449
          %v521 = vunpack.c.l.b16 %v450
          %v522 = vunpack.c.l.b16 %v451
          %v523 = vunpack.c.l.b16 %v452
          %v524 = vunpack.c.l.b16 %v453
          %v525 = vunpack.c.l.b16 %v454
          %v526 = vunpack.c.l.b16 %v455
          %v527 = vunpack.c.l.b16 %v456
          %v528 = vunpack.c.l.b16 %v457
          %v529 = vunpack.c.l.b16 %v458
          %v530 = vunpack.c.l.b16 %v459
          %v531 = vunpack.c.l.b16 %v460
          %v532 = vunpack.c.l.b16 %v461
          %v533 = vunpack.c.l.b16 %v462
          %v534 = vunpack.c.l.b16 %v463
          %v535 = vunpack.c.l.b16 %v464
          %v536 = vunpack.c.l.b16 %v465
          %v537 = vpack.c.b16 %v506, %v505
          %v538 = vpack.c.b16 %v508, %v507
          %v539 = vpack.c.b16 %v510, %v509
          %v540 = vpack.c.b16 %v512, %v511
          %v541 = vpack.c.b16 %v514, %v513
          %v542 = vpack.c.b16 %v516, %v515
          %v543 = vpack.c.b16 %v518, %v517
          %v544 = vpack.c.b16 %v520, %v519
          %v545 = vpack.c.b16 %v522, %v521
          %v546 = vpack.c.b16 %v524, %v523
          %v547 = vpack.c.b16 %v526, %v525
          %v548 = vpack.c.b16 %v528, %v527
          %v549 = vpack.c.b16 %v530, %v529
          %v550 = vpack.c.b16 %v532, %v531
          %v551 = vpack.c.b16 %v534, %v533
          %v552 = vpack.c.b16 %v536, %v535
          %569 = vmatpush.bf16.msra.mxu0 %v544
          %570 = vmatpush.bf16.msra.mxu0 %v543
          %571 = vmatpush.bf16.msra.mxu0 %v542
          %572 = vmatpush.bf16.msra.mxu0 %v541
          %573 = vmatpush.bf16.msra.mxu0 %v540
          %574 = vmatpush.bf16.msra.mxu0 %v539
          %575 = vmatpush.bf16.msra.mxu0 %v538
          %576 = vmatpush.bf16.msra.mxu0 %v537
          %577 = vmatmul.bf16.gmra.mxu0 %v469
          %v578 = vpop.f32.mrf.mxu0
          %v579 = vadd.f32 0.0, %v578
          %v580 = vpop.f32.mrf.mxu0
          %581 = vdwg.mxu0
          %582 = vmatpush.bf16.msra.mxu0 %v552
          %583 = vmatpush.bf16.msra.mxu0 %v551
          %584 = vmatpush.bf16.msra.mxu0 %v550
          %585 = vmatpush.bf16.msra.mxu0 %v549
          %586 = vmatpush.bf16.msra.mxu0 %v548
          %587 = vmatpush.bf16.msra.mxu0 %v547
          %588 = vmatpush.bf16.msra.mxu0 %v546
          %589 = vmatpush.bf16.msra.mxu0 %v545
          %590 = vmatmul.bf16.gmra.mxu0 %v470
          %v591 = vpop.f32.mrf.mxu0
          %v592 = vadd.f32 %v579, %v591
          %v593 = vpop.f32.mrf.mxu0
          %594 = vdwg.mxu0
          %v595 = vadd.f32 %v432, %v592
          %596 = vst [vmem:[#allocation2] sm:$0xff] %v595
        $region60: #{tpu_custom_call.1} parent=39 // pred_fallthru
          _
        // Predicated region
        $region61: #{tpu_custom_call.1} parent=39 // pred_check
          %p597 = pneg %p423
        $region62: #{tpu_custom_call.1} parent=39 // pred_check_branch
          %599 = sbr.rel (%p597) target = $region64
        $region63: #{tpu_custom_call.1} parent=39 // pred_region
          %v600 = vld [vmem:[#allocation2] sm:$0xff]
          %v601 = vld [vmem:[%s2] sm:$0x1]
          %v603 = vperm.slane %v601, 0
          %v605 = vadd.f32 %v600, %v603
          %v606 = vxor.u32 %v605, 2147483648
          %v607 = vmul.f32 %v606, 1.442695
          %v608 = vpow.pop %v607
          %v609 = vadd.f32 %v608, 1.0
          %v610 = vrcp.pop %v609
          %v611 = vmul.f32 %v609, %v610
          %v612 = vsub.f32 1.0, %v611
          %v613 = vmul.f32 %v610, %v612
          %v614 = vadd.f32 %v610, %v613
          %vm615 = vweird.f32 %v609
          %vm616 = vweird.f32 %v610
          %vm617 = vmor %vm615, %vm616
          %v618 = vsel %vm617, %v610, %v614
          %v619 = vand.u32 2147483647, %v609
          %vm620 = vcmp.eq.f32.partialorder %v619, 8.507059e+37
          %v621 = vand.u32 %v609, 2147483648
          %v622 = vor.u32 1.1754944e-38, %v621
          %v623 = vsel %vm620, %v622, %v618
          %v624 = vmul.f32 1.0, %v623
          %625 = vst [vmem:[#allocation2] sm:$0xff] %v624
        $region64: #{tpu_custom_call.1} parent=39 // pred_fallthru
          _
        %p626 = scmp.ge.s32.totalorder %s30, 1
        // Predicated region
        $region65: #{tpu_custom_call.1} parent=39 // pred_check
          %p627 = pneg %p626
        $region66: #{tpu_custom_call.1} parent=39 // pred_check_branch
          %629 = sbr.rel (%p627) target = $region68
        $region67: #{tpu_custom_call.1} parent=39 // pred_region
          %v630 = vld [vmem:[#allocation2] sm:$0xff]
          %v631 = vpack.c.bf16 %v630, %v630
          %v632 = vld [vmem:[%s353] sm:$0xff]
          %v633 = vld [vmem:[%s353 + $0x8] sm:$0xff]
          %v634 = vld [vmem:[%s353 + $0x10] sm:$0xff]
          %v635 = vld [vmem:[%s353 + $0x18] sm:$0xff]
          %v636 = vld [vmem:[%s353 + $0x20] sm:$0xff]
          %v637 = vld [vmem:[%s353 + $0x28] sm:$0xff]
          %v638 = vld [vmem:[%s353 + $0x30] sm:$0xff]
          %v639 = vld [vmem:[%s353 + $0x38] sm:$0xff]
          %v640 = vld [vmem:[%s353 + $0x40] sm:$0xff]
          %v641 = vld [vmem:[%s353 + $0x48] sm:$0xff]
          %v642 = vld [vmem:[%s353 + $0x50] sm:$0xff]
          %v643 = vld [vmem:[%s353 + $0x58] sm:$0xff]
          %v644 = vld [vmem:[%s353 + $0x60] sm:$0xff]
          %v645 = vld [vmem:[%s353 + $0x68] sm:$0xff]
          %v646 = vld [vmem:[%s353 + $0x70] sm:$0xff]
          %v647 = vld [vmem:[%s353 + $0x78] sm:$0xff]
          %v648 = vld [vmem:[%s414] sm:$0x3]
          %v650 = vperm.slane %v648, 0
          %v651 = vperm.slane %v648, 1
          %v670 = vunpack.c.l.b16 %v632
          %v671 = vunpack.c.h.b16 %v632
          %v672 = vunpack.c.l.b16 %v633
          %v673 = vunpack.c.h.b16 %v633
          %v674 = vunpack.c.l.b16 %v634
          %v675 = vunpack.c.h.b16 %v634
          %v676 = vunpack.c.l.b16 %v635
          %v677 = vunpack.c.h.b16 %v635
          %v678 = vunpack.c.l.b16 %v636
          %v679 = vunpack.c.h.b16 %v636
          %v680 = vunpack.c.l.b16 %v637
          %v681 = vunpack.c.h.b16 %v637
          %v682 = vunpack.c.l.b16 %v638
          %v683 = vunpack.c.h.b16 %v638
          %v684 = vunpack.c.l.b16 %v639
          %v685 = vunpack.c.h.b16 %v639
          %v686 = vunpack.c.l.b16 %v640
          %v687 = vunpack.c.h.b16 %v640
          %v688 = vunpack.c.l.b16 %v641
          %v689 = vunpack.c.h.b16 %v641
          %v690 = vunpack.c.l.b16 %v642
          %v691 = vunpack.c.h.b16 %v642
          %v692 = vunpack.c.l.b16 %v643
          %v693 = vunpack.c.h.b16 %v643
          %v694 = vunpack.c.l.b16 %v644
          %v695 = vunpack.c.h.b16 %v644
          %v696 = vunpack.c.l.b16 %v645
          %v697 = vunpack.c.h.b16 %v645
          %v698 = vunpack.c.l.b16 %v646
          %v699 = vunpack.c.h.b16 %v646
          %v700 = vunpack.c.l.b16 %v647
          %v701 = vunpack.c.h.b16 %v647
          %v702 = vpack.c.b16 %v672, %v670
          %v703 = vpack.c.b16 %v673, %v671
          %v704 = vpack.c.b16 %v676, %v674
          %v705 = vpack.c.b16 %v677, %v675
          %v706 = vpack.c.b16 %v680, %v678
          %v707 = vpack.c.b16 %v681, %v679
          %v708 = vpack.c.b16 %v684, %v682
          %v709 = vpack.c.b16 %v685, %v683
          %v710 = vpack.c.b16 %v688, %v686
          %v711 = vpack.c.b16 %v689, %v687
          %v712 = vpack.c.b16 %v692, %v690
          %v713 = vpack.c.b16 %v693, %v691
          %v714 = vpack.c.b16 %v696, %v694
          %v715 = vpack.c.b16 %v697, %v695
          %v716 = vpack.c.b16 %v700, %v698
          %v717 = vpack.c.b16 %v701, %v699
          %734 = vmatpush.bf16.msra.mxu0 %v716
          %735 = vmatpush.bf16.msra.mxu0 %v714
          %736 = vmatpush.bf16.msra.mxu0 %v712
          %737 = vmatpush.bf16.msra.mxu0 %v710
          %738 = vmatpush.bf16.msra.mxu0 %v708
          %739 = vmatpush.bf16.msra.mxu0 %v706
          %740 = vmatpush.bf16.msra.mxu0 %v704
          %741 = vmatpush.bf16.msra.mxu0 %v702
          %742 = vmatmul.bf16.gmra.mxu0 %v631
          %v743 = vpop.f32.mrf.mxu0
          %v744 = vadd.f32 %v650, %v743
          %v745 = vpop.f32.mrf.mxu0
          %746 = vdwg.mxu0
          %747 = vmatpush.bf16.msra.mxu0 %v717
          %748 = vmatpush.bf16.msra.mxu0 %v715
          %749 = vmatpush.bf16.msra.mxu0 %v713
          %750 = vmatpush.bf16.msra.mxu0 %v711
          %751 = vmatpush.bf16.msra.mxu0 %v709
          %752 = vmatpush.bf16.msra.mxu0 %v707
          %753 = vmatpush.bf16.msra.mxu0 %v705
          %754 = vmatpush.bf16.msra.mxu0 %v703
          %755 = vmatmul.bf16.gmra.mxu0 %v631
          %v756 = vpop.f32.mrf.mxu0
          %v757 = vadd.f32 %v651, %v756
          %v758 = vpop.f32.mrf.mxu0
          %759 = vdwg.mxu0
          %v760 = vmax.f32 %v744, 0.0
          %v761 = vmax.f32 %v757, 0.0
          %762 = vst [vmem:[%s397] sm:$0xff] %v760
          %763 = vst [vmem:[%s397 + $0x8] sm:$0xff] %v761
        $region68: #{tpu_custom_call.1} parent=39 // pred_fallthru
          _
        %s764 = sand.u32 %s200, 1
        %s765 = scalar_lea.sflag [#allocation5], %s764
        %s766 = sand.u32 %s200, 1
        %s767 = smul.addr %s766, 16
        %s768 = scalar_lea.vmem [#allocation9], %s767
        // Predicated region
        $region69: #{tpu_custom_call.1} parent=39 // pred_check
          %p769 = pneg %p210
        $region70: #{tpu_custom_call.1} parent=39 // pred_check_branch
          %771 = sbr.rel (%p769) target = $region72
        $region71: #{tpu_custom_call.1} parent=39 // pred_region
          %s772 = ssub.s32 %s30, 1
          %p773 = scmp.gt.s32.totalorder %s772, 0
          %s774 = scalar_select %p773, %s772, 0
          %s775 = smul.u32 2, %s774
          %777 = vsyncadd %s765, 0
          %s778 = smul.addr %s29, 2
          %s779 = sadd.s32 %s775, %s778
          %s780 = smul.addr %s779, 8
          %s781 = scalar_lea.hbm %s5, %s780
          %s783 = sshll.u32 %s768, 4
          %s784 = int_to_ptr.vmem [resolvable:$true] %s783
          %s785 = sshll.u32 %s781, 4
          %s786 = int_to_ptr.hbm [resolvable:$true] %s785
          %788 = dma.vmem_to_hbm [thread:$0]  %s784, 256, %s786, %s765
        $region72: #{tpu_custom_call.1} parent=39 // pred_fallthru
          _
      $region40: #{tpu_custom_call.1} parent=5 // pred_fallthru
        _
      %p789 = scmp.le.s32.totalorder 2, %s20
      // Predicated region
      $region73: #{tpu_custom_call.1} parent=5 // pred_check
        %p790 = pneg %p789
      $region74: #{tpu_custom_call.1} parent=5 // pred_check_branch
        %792 = sbr.rel (%p790) target = $region76
      $region75: #{tpu_custom_call.1} parent=5 // pred_region
        %s793 = ssub.s32 %s20, 2
        // Predicated region
        $region77: #{tpu_custom_call.1} parent=75 // pred_check
          %p794 = pneg %p216
        $region78: #{tpu_custom_call.1} parent=75 // pred_check_branch
          %796 = sbr.rel (%p794) target = $region80
        $region79: #{tpu_custom_call.1} parent=75 // pred_region
          %s797 = sand.u32 %s201, 1
          %s798 = scalar_lea.sflag [#allocation5], %s797
          %s799 = sand.u32 %s201, 1
          %s800 = smul.addr %s799, 16
          %s801 = scalar_lea.vmem [#allocation9], %s800
          %803 = dma.done %s798, 256
        $region80: #{tpu_custom_call.1} parent=75 // pred_fallthru
          _
      $region76: #{tpu_custom_call.1} parent=5 // pred_fallthru
        _
    $region6: #{tpu_custom_call.1} parent=1 // loop_footer
      %s24 = sadd.s32 1, %s20
    $region7: #{tpu_custom_call.1} parent=1 // loop_footer_branch
      %19 = sbr.rel target = $region3
    $region8: #{tpu_custom_call.1} parent=1 // loop_exit
      _
    %804 = vsyncpa [#allocation4], 1
    %s805 = scalar_lea.sflag [#allocation4], 1
    %806 = vsyncpa %s805, 1
    %807 = vsyncpa [#allocation7], 1
    %s808 = scalar_lea.sflag [#allocation7], 1
    %809 = vsyncpa %s808, 1
    %810 = vsyncpa [#allocation5], 1
    %s811 = scalar_lea.sflag [#allocation5], 1
    %812 = vsyncpa %s811, 1

</llo_original>
